<compile_context>
chip_gen: v7x
topology: tpu7x:2x2x1
jax: 0.10.0
libtpu: 0.0.40
codegen_flags: <defaults>
</compile_context>

<pallas_src>
import numpy as np
import jax
import jax.numpy as jnp
from jax.experimental import pallas as pl
from jax.experimental.pallas import tpu as pltpu

# synthetic frontend / separator configuration (config['frontend'] == 'stft')
N_FFT = 32
HOP = N_FFT // 2               # 50% overlap -> reshape-based framing / overlap-add
N_FREQS = N_FFT // 2 + 1       # onesided -> 17
FP = 32                        # freq bins zero-padded to a lane-friendly width
HIDDEN = 32
N_SRC = 2                      # separator emits N_SRC masked spectrograms

MXU_DTYPE = jnp.bfloat16       # MXU operand dtype (f32 accumulation everywhere)
RB_CAP = 2048                  # max rows per grid block (VMEM is not the constraint)


def separator_kernel(frames_ref, wfwd_ref, w1_ref, b1_ref, w2_ref, b2_ref,
                     wdec_ref, out_ref):
    """One row block of B*T frames.

    frames_ref: (rb, n_fft)              framed time-domain rows (bf16)
    wfwd      : (n_fft, 128)             fused windowed real-DFT [Re|Im|Re|Im]
    w1,b1,w2,b2                           mask-estimation MLP; w2 emits [m0|m0|m1|m1]
    wdec      : (256, 128)               block-diag inverse real-DFT with the
                                         interior WOLA 1/env folded into columns
    out_ref   : (rb//2, 128)             lane-dense synthesis-frame slab (f32)
    """
    frames = frames_ref[...]                                   # (rb, n_fft)
    rb = frames.shape[0]

    # --- STFT encoder: one fused MXU matmul -> [Re | Im | Re | Im] ---
    x = jnp.dot(frames, wfwd_ref[...], preferred_element_type=jnp.float32)  # (rb, 128)

    # --- separator model: small MLP mask estimator on the magnitude (f32) ---
    x_re = x[:, :FP]
    x_im = x[:, FP:2 * FP]
    mag = jnp.sqrt(x_re * x_re + x_im * x_im + 1e-8)           # (rb, FP)
    h = jnp.maximum(
        jnp.dot(mag.astype(MXU_DTYPE), w1_ref[...],
                preferred_element_type=jnp.float32) + b1_ref[...],
        0.0)
    masks = jax.nn.sigmoid(
        jnp.dot(h.astype(MXU_DTYPE), w2_ref[...],
                preferred_element_type=jnp.float32) + b2_ref[...]
    )                                                          # (rb, 128) [m0|m0|m1|m1]

    # --- mask application: single full-vreg multiply -> [m0*Re|m0*Im|m1*Re|m1*Im] ---
    y = masks * x                                              # (rb, 128)

    # --- inverse real DFT (+ folded interior WOLA 1/env) for both sources in ONE
    #     matmul; pairing top/bottom row halves along lanes gives K=256, N=128
    #     (lane-dense output store). ---
    yd = jnp.concatenate([y[:rb // 2, :], y[rb // 2:, :]], axis=1)          # (rb//2, 256)
    rec = jnp.dot(yd.astype(MXU_DTYPE), wdec_ref[...],
                  preferred_element_type=jnp.float32)                       # (rb//2, 128)
    out_ref[...] = rec.astype(out_ref.dtype)


def make_params():
    """Deterministic synthetic parameters (no checkpoint load), pre-padded/fused."""
    n = N_FFT
    k = np.arange(n, dtype=np.float64)[:, None]
    f = np.arange(N_FREQS, dtype=np.float64)[None, :]
    ang = 2.0 * np.pi * k * f / n
    # periodic Hann window (analysis == synthesis window)
    window = 0.5 - 0.5 * np.cos(2.0 * np.pi * np.arange(n) / n)

    # forward (encoder) windowed real-DFT, padded to FP bins, duplicated [Re|Im|Re|Im]
    wre = np.zeros((n, FP)); wre[:, :N_FREQS] = window[:, None] * np.cos(ang)
    wim = np.zeros((n, FP)); wim[:, :N_FREQS] = -window[:, None] * np.sin(ang)
    wfwd = np.concatenate([wre, wim, wre, wim], axis=1)        # (n_fft, 128)

    # inverse (decoder) matrices: onesided scaling + synthesis window folded in
    c = np.where((np.arange(N_FREQS) == 0) | (np.arange(N_FREQS) == n // 2), 1.0, 2.0)
    ire = np.zeros((FP, n)); ire[:N_FREQS] = (c[:, None] * np.cos(ang.T) / n) * window[None, :]
    iim = np.zeros((FP, n)); iim[:N_FREQS] = (c[:, None] * np.sin(ang.T) / n) * window[None, :]

    # fold the interior WOLA 1/env normalization (HOP-periodic) into every column
    win_sq = window ** 2
    env_int = win_sq[:HOP] + win_sq[HOP:]                      # e[i], i in [0, HOP)
    col_scale = 1.0 / np.tile(env_int, n // HOP)               # (n,)
    ire = ire * col_scale[None, :]
    iim = iim * col_scale[None, :]

    # block decoder: rows [m_s*Re | m_s*Im] per source -> cols [frame_s]; doubled
    # along the diagonal so two row-halves decode in one (256,128) matmul.
    wdec1 = np.zeros((2 * N_SRC * FP, N_SRC * n))
    for s in range(N_SRC):
        wdec1[(2 * s) * FP:(2 * s + 1) * FP, s * n:(s + 1) * n] = ire
        wdec1[(2 * s + 1) * FP:(2 * s + 2) * FP, s * n:(s + 1) * n] = -iim
    wdec = np.zeros((2 * 2 * N_SRC * FP, 2 * N_SRC * n))
    wdec[:2 * N_SRC * FP, :N_SRC * n] = wdec1
    wdec[2 * N_SRC * FP:, N_SRC * n:] = wdec1

    key = jax.random.PRNGKey(0)
    k1, k2 = jax.random.split(key)
    w1u = np.asarray(jax.random.normal(k1, (N_FREQS, HIDDEN), jnp.float32)) * 0.1
    w2u = np.asarray(jax.random.normal(k2, (HIDDEN, N_SRC * N_FREQS), jnp.float32)) * 0.1
    w1 = np.zeros((FP, HIDDEN), np.float32); w1[:N_FREQS] = w1u
    # masks come out of the MLP already laid out [m0 | m0 | m1 | m1] (128 lanes)
    w2 = np.zeros((HIDDEN, 2 * N_SRC * FP), np.float32)
    for blk, s in enumerate((0, 0, 1, 1)):
        w2[:, blk * FP:blk * FP + N_FREQS] = w2u[:, s * N_FREQS:(s + 1) * N_FREQS]
    b1 = np.zeros((1, HIDDEN), np.float32)
    b2 = np.zeros((1, 2 * N_SRC * FP), np.float32)

    # edge fix-ups (first/last HOP output samples see a single-frame envelope,
    # the interior 1/env is already inside wdec)
    edge_first = (env_int / np.maximum(win_sq[:HOP], 1e-8)).astype(np.float32)
    edge_last = (env_int / np.maximum(win_sq[HOP:], 1e-8)).astype(np.float32)

    # bf16 MXU operands introduce ~1e-3 relative error in the DFT/iDFT; accumulation
    # stays f32 via preferred_element_type.
    return dict(
        wfwd=jnp.asarray(wfwd, MXU_DTYPE),
        w1=jnp.asarray(w1, MXU_DTYPE), b1=jnp.asarray(b1, jnp.float32),
        w2=jnp.asarray(w2, MXU_DTYPE), b2=jnp.asarray(b2, jnp.float32),
        wdec=jnp.asarray(wdec, MXU_DTYPE),
        edge_first=jnp.asarray(edge_first), edge_last=jnp.asarray(edge_last),
    )


def _num_tensorcores():
    """2 TensorCores per chip only on v7x; v5e/v6e are single-TC."""
    try:
        kind = jax.devices()[0].device_kind.lower()
    except Exception:
        return 1
    return 2 if ("v7" in kind or "tpu7" in kind) else 1


def separator_forward(mix, params):
    """Equivalent of Separator.forward(mix) for mix of shape (n_batch, n_samples)."""
    B, n_samples = mix.shape
    T = (n_samples - N_FFT) // HOP + 1
    out_len = (T - 1) * HOP + N_FFT

    mix = mix.astype(jnp.float32)

    # --- framing via the 50%-overlap reshape trick (no gather): (B*T, n_fft) ---
    # TODO(synk): framing could also be done inside the kernel to skip one small XLA pass.
    a = mix[:, :T * HOP].reshape(B, T, HOP)
    b = mix[:, HOP:HOP + T * HOP].reshape(B, T, HOP)
    frames = jnp.concatenate([a, b], axis=-1).reshape(B * T, N_FFT).astype(MXU_DTYPE)

    # --- row-block sizing: one maximal block on single-TC chips (v5e/v6e); an even
    #     block count >= 2 on v7x so both TensorCores get balanced work ---
    rows = B * T
    num_tc = _num_tensorcores()
    num_blocks = max(num_tc, pl.cdiv(rows, RB_CAP))
    if num_tc > 1 and num_blocks % num_tc:
        num_blocks += num_tc - (num_blocks % num_tc)
    rb = max(16, ((pl.cdiv(rows, num_blocks) + 15) // 16) * 16)  # multiple of 16
    rows_padded = num_blocks * rb
    frames = jnp.pad(frames, ((0, rows_padded - rows), (0, 0)))

    def weight_spec(shape):
        return pl.BlockSpec(shape, lambda i: (0, 0))

    # TODO(synk): weights could be single-buffered (pipeline_mode=pl.Buffered(1));
    # skipped since the ~150 KB VMEM saving is cosmetic at these sizes.
    slab = pl.pallas_call(
        separator_kernel,
        out_shape=jax.ShapeDtypeStruct((rows_padded // 2, 2 * N_SRC * N_FFT),
                                       jnp.float32),
        grid=(num_blocks,),
        in_specs=[
            pl.BlockSpec((rb, N_FFT), lambda i: (i, 0)),            # frames
            weight_spec((N_FFT, 2 * N_SRC * FP)),                   # wfwd (32, 128)
            weight_spec((FP, HIDDEN)),                              # w1
            weight_spec((1, HIDDEN)),                               # b1
            weight_spec((HIDDEN, 2 * N_SRC * FP)),                  # w2  (32, 128)
            weight_spec((1, 2 * N_SRC * FP)),                       # b2
            weight_spec((2 * 2 * N_SRC * FP, 2 * N_SRC * N_FFT)),   # wdec (256, 128)
        ],
        out_specs=pl.BlockSpec((rb // 2, 2 * N_SRC * N_FFT), lambda i: (i, 0)),
        compiler_params=pltpu.CompilerParams(dimension_semantics=("parallel",)),
    )(frames, params['wfwd'], params['w1'], params['b1'],
      params['w2'], params['b2'], params['wdec'])

    # --- unscramble lane-dense slab back to (B, n_src, T, n_fft) (tiny glue ops) ---
    rec = slab.reshape(num_blocks, rb // 2, 2, N_SRC, N_FFT)
    rec = jnp.transpose(rec, (0, 2, 1, 3, 4)).reshape(rows_padded, N_SRC, N_FFT)
    rec = rec[:rows].reshape(B, T, N_SRC, N_FFT).transpose(0, 2, 1, 3)   # (B,S,T,n_fft)

    # --- iSTFT overlap-add via the 50%-overlap reshape trick (2 pads + 1 add);
    #     interior WOLA 1/env already folded into wdec, only edges need fixing ---
    first = rec[..., :HOP].reshape(B, N_SRC, T * HOP)
    second = rec[..., HOP:].reshape(B, N_SRC, T * HOP)
    y = (jnp.pad(first, ((0, 0), (0, 0), (0, HOP)))
         + jnp.pad(second, ((0, 0), (0, 0), (HOP, 0))))                  # (B,S,out_len)
    y = y.at[..., :HOP].multiply(params['edge_first'])
    y = y.at[..., out_len - HOP:].multiply(params['edge_last'])

    # torch.nn.functional.pad(y, (0, n_samples - y.shape[-1]))
    # TODO(synk): torch.stft/istft default center=True edge padding not reproduced;
    # this implements center=False framing, so the pad below is the wrapper's pad.
    y = jnp.pad(y, ((0, 0), (0, 0), (0, n_samples - out_len)))

    # y.view(n_batch, -1, n_samples)
    return y.reshape(B, -1, n_samples)


if __name__ == "__main__":
    params = make_params()
    key = jax.random.PRNGKey(0)
    B, n_samples = 2, 256
    mix = jax.random.normal(key, (B, n_samples), jnp.float32)

    out = jax.jit(lambda m: separator_forward(m, params))(mix)
    out = jax.block_until_ready(out)

    assert out.shape == (B, N_SRC, n_samples), out.shape
    assert bool(jnp.all(jnp.isfinite(out)))
    print("KERNEL_OK")
</pallas_src>

<mosaic_0001>
module attributes {stable_mosaic.version = 11 : i64} {
  func.func @separator_kernel(%arg0: i32, %arg1: memref<32x32xbf16, #tpu.memory_space<vmem>>, %arg2: memref<32x128xbf16, #tpu.memory_space<vmem>>, %arg3: memref<32x32xbf16, #tpu.memory_space<vmem>>, %arg4: memref<1x32xf32, #tpu.memory_space<vmem>>, %arg5: memref<32x128xbf16, #tpu.memory_space<vmem>>, %arg6: memref<1x128xf32, #tpu.memory_space<vmem>>, %arg7: memref<256x128xbf16, #tpu.memory_space<vmem>>, %arg8: memref<16x128xf32, #tpu.memory_space<vmem>>) attributes {dimension_semantics = [#tpu.dimension_semantics<parallel>], iteration_bounds = array<i64: 1>, scalar_prefetch = 0 : i64, scratch_operands = 0 : i64, tpu.core_type = #tpu.core_type<tc>, window_params = [{transform_indices = @transform_0, window_bounds = array<i64: 32, 32>}, {pipeline_mode = #tpu.pipeline_mode<synchronous>, transform_indices = @transform_1, window_bounds = array<i64: 32, 128>}, {pipeline_mode = #tpu.pipeline_mode<synchronous>, transform_indices = @transform_2, window_bounds = array<i64: 32, 32>}, {pipeline_mode = #tpu.pipeline_mode<synchronous>, transform_indices = @transform_3, window_bounds = array<i64: 1, 32>}, {pipeline_mode = #tpu.pipeline_mode<synchronous>, transform_indices = @transform_4, window_bounds = array<i64: 32, 128>}, {pipeline_mode = #tpu.pipeline_mode<synchronous>, transform_indices = @transform_5, window_bounds = array<i64: 1, 128>}, {pipeline_mode = #tpu.pipeline_mode<synchronous>, transform_indices = @transform_6, window_bounds = array<i64: 256, 128>}, {transform_indices = @transform_7, window_bounds = array<i64: 16, 128>}]} {
    %c0 = arith.constant 0 : index
    %c0_0 = arith.constant 0 : index
    %0 = vector.load %arg1[%c0, %c0_0] : memref<32x32xbf16, #tpu.memory_space<vmem>>, vector<32x32xbf16>
    %c0_1 = arith.constant 0 : index
    %c0_2 = arith.constant 0 : index
    %1 = vector.load %arg2[%c0_1, %c0_2] : memref<32x128xbf16, #tpu.memory_space<vmem>>, vector<32x128xbf16>
    %cst = arith.constant dense<0.000000e+00> : vector<32x128xf32>
    %2 = tpu.matmul %0, %1, %cst {dimension_numbers = #tpu.dot_dimension_numbers<[1], [0], [0], [1], [0, 0, 1, 1], [], []>} : vector<32x32xbf16>, vector<32x128xbf16>, vector<32x128xf32> -> vector<32x128xf32>
    %3 = vector.extract_strided_slice %2 {offsets = [0, 0], sizes = [32, 32], strides = [1, 1]} : vector<32x128xf32> to vector<32x32xf32>
    %4 = vector.extract_strided_slice %2 {offsets = [0, 32], sizes = [32, 32], strides = [1, 1]} : vector<32x128xf32> to vector<32x32xf32>
    %5 = arith.mulf %3, %3 : vector<32x32xf32>
    %6 = arith.mulf %4, %4 : vector<32x32xf32>
    %7 = arith.addf %5, %6 : vector<32x32xf32>
    %cst_3 = arith.constant 9.99999993E-9 : f32
    %8 = vector.broadcast %cst_3 : f32 to vector<32x32xf32>
    %9 = arith.addf %7, %8 : vector<32x32xf32>
    %10 = math.sqrt %9 : vector<32x32xf32>
    %11 = arith.truncf %10 : vector<32x32xf32> to vector<32x32xbf16>
    %c0_4 = arith.constant 0 : index
    %c0_5 = arith.constant 0 : index
    %12 = vector.load %arg3[%c0_4, %c0_5] : memref<32x32xbf16, #tpu.memory_space<vmem>>, vector<32x32xbf16>
    %cst_6 = arith.constant dense<0.000000e+00> : vector<32x32xf32>
    %13 = tpu.matmul %11, %12, %cst_6 {dimension_numbers = #tpu.dot_dimension_numbers<[1], [0], [0], [1], [0, 0, 1, 1], [], []>} : vector<32x32xbf16>, vector<32x32xbf16>, vector<32x32xf32> -> vector<32x32xf32>
    %c0_7 = arith.constant 0 : index
    %c0_8 = arith.constant 0 : index
    %14 = vector.load %arg4[%c0_7, %c0_8] : memref<1x32xf32, #tpu.memory_space<vmem>>, vector<1x32xf32>
    %15 = vector.broadcast %14 : vector<1x32xf32> to vector<32x32xf32>
    %16 = arith.addf %13, %15 : vector<32x32xf32>
    %cst_9 = arith.constant 0.000000e+00 : f32
    %17 = vector.broadcast %cst_9 : f32 to vector<32x32xf32>
    %18 = arith.maximumf %16, %17 : vector<32x32xf32>
    %19 = arith.truncf %18 : vector<32x32xf32> to vector<32x32xbf16>
    %c0_10 = arith.constant 0 : index
    %c0_11 = arith.constant 0 : index
    %20 = vector.load %arg5[%c0_10, %c0_11] : memref<32x128xbf16, #tpu.memory_space<vmem>>, vector<32x128xbf16>
    %cst_12 = arith.constant dense<0.000000e+00> : vector<32x128xf32>
    %21 = tpu.matmul %19, %20, %cst_12 {dimension_numbers = #tpu.dot_dimension_numbers<[1], [0], [0], [1], [0, 0, 1, 1], [], []>} : vector<32x32xbf16>, vector<32x128xbf16>, vector<32x128xf32> -> vector<32x128xf32>
    %c0_13 = arith.constant 0 : index
    %c0_14 = arith.constant 0 : index
    %22 = vector.load %arg6[%c0_13, %c0_14] : memref<1x128xf32, #tpu.memory_space<vmem>>, vector<1x128xf32>
    %23 = vector.broadcast %22 : vector<1x128xf32> to vector<32x128xf32>
    %24 = arith.addf %21, %23 : vector<32x128xf32>
    %25 = arith.negf %24 : vector<32x128xf32>
    %26 = math.exp %25 : vector<32x128xf32>
    %cst_15 = arith.constant 1.000000e+00 : f32
    %27 = vector.broadcast %cst_15 : f32 to vector<32x128xf32>
    %28 = arith.addf %27, %26 : vector<32x128xf32>
    %29 = arith.divf %27, %28 : vector<32x128xf32>
    %30 = arith.mulf %29, %2 : vector<32x128xf32>
    %31 = vector.extract_strided_slice %30 {offsets = [0, 0], sizes = [16, 128], strides = [1, 1]} : vector<32x128xf32> to vector<16x128xf32>
    %32 = vector.extract_strided_slice %30 {offsets = [16, 0], sizes = [16, 128], strides = [1, 1]} : vector<32x128xf32> to vector<16x128xf32>
    %33 = tpu.concatenate %31, %32 in 1 : vector<16x128xf32>, vector<16x128xf32> -> vector<16x256xf32>
    %34 = arith.truncf %33 : vector<16x256xf32> to vector<16x256xbf16>
    %c0_16 = arith.constant 0 : index
    %c0_17 = arith.constant 0 : index
    %35 = vector.load %arg7[%c0_16, %c0_17] : memref<256x128xbf16, #tpu.memory_space<vmem>>, vector<256x128xbf16>
    %cst_18 = arith.constant dense<0.000000e+00> : vector<16x128xf32>
    %36 = tpu.matmul %34, %35, %cst_18 {dimension_numbers = #tpu.dot_dimension_numbers<[1], [0], [0], [1], [0, 0, 1, 1], [], []>} : vector<16x256xbf16>, vector<256x128xbf16>, vector<16x128xf32> -> vector<16x128xf32>
    %c0_19 = arith.constant 0 : index
    %c0_20 = arith.constant 0 : index
    %37 = vector.load %arg8[%c0_19, %c0_20] : memref<16x128xf32, #tpu.memory_space<vmem>>, vector<16x128xf32>
    tpu.vector_store %arg8[%c0_19, %c0_20], %36 {strides = array<i32>} : memref<16x128xf32, #tpu.memory_space<vmem>>, vector<16x128xf32>,
    return
  }
  func.func @transform_0(%arg0: i32) -> (i32, i32) {
    %c0_i32 = arith.constant 0 : i32
    %c0_i32_0 = arith.constant 0 : i32
    return %arg0, %c0_i32 : i32, i32
  }
  func.func @transform_1(%arg0: i32) -> (i32, i32) {
    %c0_i32 = arith.constant 0 : i32
    %c0_i32_0 = arith.constant 0 : i32
    %c0_i32_1 = arith.constant 0 : i32
    return %c0_i32, %c0_i32_0 : i32, i32
  }
  func.func @transform_2(%arg0: i32) -> (i32, i32) {
    %c0_i32 = arith.constant 0 : i32
    %c0_i32_0 = arith.constant 0 : i32
    %c0_i32_1 = arith.constant 0 : i32
    return %c0_i32, %c0_i32_0 : i32, i32
  }
  func.func @transform_3(%arg0: i32) -> (i32, i32) {
    %c0_i32 = arith.constant 0 : i32
    %c0_i32_0 = arith.constant 0 : i32
    %c0_i32_1 = arith.constant 0 : i32
    return %c0_i32, %c0_i32_0 : i32, i32
  }
  func.func @transform_4(%arg0: i32) -> (i32, i32) {
    %c0_i32 = arith.constant 0 : i32
    %c0_i32_0 = arith.constant 0 : i32
    %c0_i32_1 = arith.constant 0 : i32
    return %c0_i32, %c0_i32_0 : i32, i32
  }
  func.func @transform_5(%arg0: i32) -> (i32, i32) {
    %c0_i32 = arith.constant 0 : i32
    %c0_i32_0 = arith.constant 0 : i32
    %c0_i32_1 = arith.constant 0 : i32
    return %c0_i32, %c0_i32_0 : i32, i32
  }
  func.func @transform_6(%arg0: i32) -> (i32, i32) {
    %c0_i32 = arith.constant 0 : i32
    %c0_i32_0 = arith.constant 0 : i32
    %c0_i32_1 = arith.constant 0 : i32
    return %c0_i32, %c0_i32_0 : i32, i32
  }
  func.func @transform_7(%arg0: i32) -> (i32, i32) {
    %c0_i32 = arith.constant 0 : i32
    %c0_i32_0 = arith.constant 0 : i32
    return %arg0, %c0_i32 : i32, i32
  }
}

</mosaic_0001>

<llo_original>
// kernel: _lambda_.1
$region0: #{_lambda_.1}
  #allocation0 [shape = 'u32[]', space=smem, size = 0x4, offset = 0x4, fixed_abs, tag = 'smem constant byte address 0x4 - core index']
  #allocation1 [shape = 'u32[144,128]{1,0:T(1,128)}', space=vmem, size = 0x12000, scoped, tag = 'internal scratch']
  %s0 = inlined_call_operand.vmem [shape: bf16[32,32], index: 0, kind: input, shape index: {}]
  %s1 = inlined_call_operand.hbm [shape: bf16[32,128], index: 1, kind: input, shape index: {}]
  %s2 = inlined_call_operand.vmem [shape: bf16[32,32], index: 2, kind: input, shape index: {}]
  %s3 = inlined_call_operand.vmem [shape: f32[1,32], index: 3, kind: input, shape index: {}]
  %s4 = inlined_call_operand.vmem [shape: bf16[32,128], index: 4, kind: input, shape index: {}]
  %s5 = inlined_call_operand.vmem [shape: f32[1,128], index: 5, kind: input, shape index: {}]
  %s6 = inlined_call_operand.vmem [shape: bf16[256,128], index: 6, kind: input, shape index: {}]
  %s7 = inlined_call_operand.vmem [shape: f32[16,128], index: 7, kind: output, shape index: {}]
  %s8 = sld [smem:[#allocation0]]
  $region42: #{_lambda_.1} parent=0
    _
  %s10 = ssub.s32 1, %s8
  %s11 = scalar_select 0, %s10, %s8
  $region1: #{_lambda_.1} parent=0
    #allocation2 [shape = 'u8[8192]{0}', space=vmem, size = 0x2000, scoped, tag = 'input window, operand 1, single buffered']
    #allocation3 [shape = 's32[1]{0}', space=sflag, size = 0x4, scoped, tag = 'scoped memory for _lambda_.1']
    %12 = vsyncpa [#allocation3], 0
    // Predicated region
    $region2: #{_lambda_.1} parent=1 // pred_check
      _
    $region3: #{_lambda_.1} parent=1 // pred_check_branch
      %14 = sbr.rel (0) target = $region5
    $region4: #{_lambda_.1} parent=1 // pred_region
      _
    $region5: #{_lambda_.1} parent=1 // pred_fallthru
      _
    // Predicated region
    $region6: #{_lambda_.1} parent=1 // pred_check
      _
    $region7: #{_lambda_.1} parent=1 // pred_check_branch
      %16 = sbr.rel (0) target = $region9
    $region8: #{_lambda_.1} parent=1 // pred_region
      %s18 = ssub.s32 256, 256
      %19 = vsyncadd [#allocation3], %s18
      %s20 = sshll.u32 [#allocation2], 4
      %s21 = int_to_ptr.vmem [resolvable:$true] %s20
      %26 = dma.hbm_to_vmem [thread:$0]  %s1, 256, %s21, [#allocation3], 64, 64, 4
    $region9: #{_lambda_.1} parent=1 // pred_fallthru
      _
    // Predicated region
    $region10: #{_lambda_.1} parent=1 // pred_check
      _
    $region11: #{_lambda_.1} parent=1 // pred_check_branch
      %28 = sbr.rel (0) target = $region13
    $region12: #{_lambda_.1} parent=1 // pred_region
      _
    $region13: #{_lambda_.1} parent=1 // pred_fallthru
      _
    // Predicated region
    $region14: #{_lambda_.1} parent=1 // pred_check
      _
    $region15: #{_lambda_.1} parent=1 // pred_check_branch
      %30 = sbr.rel (0) target = $region17
    $region16: #{_lambda_.1} parent=1 // pred_region
      _
    $region17: #{_lambda_.1} parent=1 // pred_fallthru
      _
    // Predicated region
    $region18: #{_lambda_.1} parent=1 // pred_check
      _
    $region19: #{_lambda_.1} parent=1 // pred_check_branch
      %32 = sbr.rel (0) target = $region21
    $region20: #{_lambda_.1} parent=1 // pred_region
      _
    $region21: #{_lambda_.1} parent=1 // pred_fallthru
      _
    // Predicated region
    $region22: #{_lambda_.1} parent=1 // pred_check
      _
    $region23: #{_lambda_.1} parent=1 // pred_check_branch
      %34 = sbr.rel (0) target = $region25
    $region24: #{_lambda_.1} parent=1 // pred_region
      _
    $region25: #{_lambda_.1} parent=1 // pred_fallthru
      _
    // Predicated region
    $region26: #{_lambda_.1} parent=1 // pred_check
      _
    $region27: #{_lambda_.1} parent=1 // pred_check_branch
      %36 = sbr.rel (0) target = $region29
    $region28: #{_lambda_.1} parent=1 // pred_region
      _
    $region29: #{_lambda_.1} parent=1 // pred_fallthru
      _
    // Predicated region
    $region30: #{_lambda_.1} parent=1 // pred_check
      _
    $region31: #{_lambda_.1} parent=1 // pred_check_branch
      %38 = sbr.rel (0) target = $region33
    $region32: #{_lambda_.1} parent=1 // pred_region
      %39 = dma.done [#allocation3], 256
    $region33: #{_lambda_.1} parent=1 // pred_fallthru
      _
    %v41 = vld [vmem:[%s0] sm:$0xf]
    %v42 = vld [vmem:[%s0 + $0x4] sm:$0xf]
    %v43 = vld [vmem:[%s0 + $0x8] sm:$0xf]
    %v44 = vld [vmem:[%s0 + $0xc] sm:$0xf]
    %v45 = vld [vmem:[#allocation2] sm:$0xf]
    %v46 = vld [vmem:[#allocation2 + $0x4] sm:$0xf]
    %v47 = vld [vmem:[#allocation2 + $0x8] sm:$0xf]
    %v48 = vld [vmem:[#allocation2 + $0xc] sm:$0xf]
    %v53 = vunpack.c.l.b16 %v41
    %v54 = vunpack.c.l.b16 %v42
    %v55 = vunpack.c.l.b16 %v43
    %v56 = vunpack.c.l.b16 %v44
    %v57 = vpack.c.b16 %v54, %v53
    %v58 = vpack.c.b16 %v56, %v55
    %v63 = vunpack.c.l.b16 %v45
    %v64 = vunpack.c.l.b16 %v46
    %v65 = vunpack.c.l.b16 %v47
    %v66 = vunpack.c.l.b16 %v48
    %v67 = vpack.c.b16 %v64, %v63
    %v68 = vpack.c.b16 %v66, %v65
    %vm71 = vcmask 261120
    %v73 = vsel %vm71, %v57, 0
    %v76 = vsel %vm71, %v58, 0
    %78 = vmatprep.subr.bf16.mxu0 0
    %79 = vmatpush1.bf16.msra.mxu0 %v67
    %80 = vmatprep.subr.bf16.mxu0 0
    %81 = vmatpush1.bf16.msra.mxu0 %v68
    %82 = vmatprep.subr.bf16.mxu0 0
    %83 = vmatpush1.bf16.msra.mxu0 0
    %84 = vmatprep.subr.bf16.mxu0 0
    %85 = vmatpush1.bf16.msra.mxu0 0
    %86 = vmatprep.subr.bf16.mxu0 0
    %87 = vmatpush1.bf16.msra.mxu0 0
    %88 = vmatprep.subr.bf16.mxu0 0
    %89 = vmatpush1.bf16.msra.mxu0 0
    %90 = vmatprep.subr.bf16.mxu0 0
    %91 = vmatpush1.bf16.msra.mxu0 0
    %92 = vmatprep.subr.bf16.mxu0 0
    %93 = vmatpush1.bf16.msra.mxu0 0
    %94 = vmatprep.subr.bf16.mxu0 0
    %95 = vmatpush1.bf16.msra.mxu0 0
    %96 = vmatprep.subr.bf16.mxu0 0
    %97 = vmatpush1.bf16.msra.mxu0 0
    %98 = vmatprep.subr.bf16.mxu0 0
    %99 = vmatpush1.bf16.msra.mxu0 0
    %100 = vmatprep.subr.bf16.mxu0 0
    %101 = vmatpush1.bf16.msra.mxu0 0
    %102 = vmatprep.subr.bf16.mxu0 0
    %103 = vmatpush1.bf16.msra.mxu0 0
    %104 = vmatprep.subr.bf16.mxu0 0
    %105 = vmatpush1.bf16.msra.mxu0 0
    %106 = vmatprep.subr.bf16.mxu0 0
    %107 = vmatpush1.bf16.msra.mxu0 0
    %108 = vmatprep.subr.bf16.mxu0 0
    %109 = vmatpush1.bf16.msra.mxu0 0
    %110 = vmatprep.mubr.bf16.mxu0 0
    %111 = vmatmul.mubr.bf16.gmra.mrb[0].mxu0 %v73
    %v112 = vpop.f32.mrb[0].mxu0
    %v113 = vadd.f32 0.0, %v112
    %v114 = vpop.f32.mrb[0].mxu0
    %v115 = vpop.f32.mrb[0].mxu0
    %v116 = vadd.f32 0.0, %v115
    %v117 = vpop.f32.mrb[0].mxu0
    %118 = vmatprep.mubr.bf16.mxu0 0
    %119 = vmatmul.mubr.bf16.gmra.mrb[0].mxu0 %v76
    %v120 = vpop.f32.mrb[0].mxu0
    %v121 = vadd.f32 0.0, %v120
    %v122 = vpop.f32.mrb[0].mxu0
    %v123 = vpop.f32.mrb[0].mxu0
    %v124 = vadd.f32 0.0, %v123
    %v125 = vpop.f32.mrb[0].mxu0
    %126 = vdwg.mxu0
    %v127 = vmul.f32 %v113, %v113
    %v128 = vmul.f32 %v116, %v116
    %v129 = vmul.f32 %v121, %v121
    %v130 = vmul.f32 %v124, %v124
    %135 = vrot.lane.b32.xlu0 %v127, 96
    %v136 = vpop.permute.xlu0 %135
    %137 = vrot.lane.b32.xlu0 %v128, 96
    %v138 = vpop.permute.xlu0 %137
    %139 = vrot.lane.b32.xlu0 %v129, 96
    %v140 = vpop.permute.xlu0 %139
    %141 = vrot.lane.b32.xlu0 %v130, 96
    %v142 = vpop.permute.xlu0 %141
    %v147 = vadd.f32 %v127, %v136
    %v148 = vadd.f32 %v128, %v138
    %v149 = vadd.f32 %v129, %v140
    %v150 = vadd.f32 %v130, %v142
    %v151 = vadd.f32 %v147, 1e-08
    %v152 = vadd.f32 %v148, 1e-08
    %v153 = vadd.f32 %v149, 1e-08
    %v154 = vadd.f32 %v150, 1e-08
    %v155 = vrsqrt.pop %v151
    %v156 = vmul.f32 %v151, %v155
    %vm157 = vcmp.eq.f32.partialorder %v151, inf
    %v158 = vsel %vm157, %v151, %v156
    %vm159 = vcmp.eq.f32.partialorder %v151, 0.0
    %v160 = vand.u32 %v151, 2147483648
    %v161 = vsel %vm159, %v160, %v158
    %v162 = vrsqrt.pop %v152
    %v163 = vmul.f32 %v152, %v162
    %vm164 = vcmp.eq.f32.partialorder %v152, inf
    %v165 = vsel %vm164, %v152, %v163
    %vm166 = vcmp.eq.f32.partialorder %v152, 0.0
    %v167 = vand.u32 %v152, 2147483648
    %v168 = vsel %vm166, %v167, %v165
    %v169 = vrsqrt.pop %v153
    %v170 = vmul.f32 %v153, %v169
    %vm171 = vcmp.eq.f32.partialorder %v153, inf
    %v172 = vsel %vm171, %v153, %v170
    %vm173 = vcmp.eq.f32.partialorder %v153, 0.0
    %v174 = vand.u32 %v153, 2147483648
    %v175 = vsel %vm173, %v174, %v172
    %v176 = vrsqrt.pop %v154
    %v177 = vmul.f32 %v154, %v176
    %vm178 = vcmp.eq.f32.partialorder %v154, inf
    %v179 = vsel %vm178, %v154, %v177
    %vm180 = vcmp.eq.f32.partialorder %v154, 0.0
    %v181 = vand.u32 %v154, 2147483648
    %v182 = vsel %vm180, %v181, %v179
    %v183 = vpack.c.bf16 %v168, %v161
    %v184 = vpack.c.bf16 %v182, %v175
    %v185 = vld [vmem:[%s2] sm:$0xf]
    %v186 = vld [vmem:[%s2 + $0x4] sm:$0xf]
    %v187 = vld [vmem:[%s2 + $0x8] sm:$0xf]
    %v188 = vld [vmem:[%s2 + $0xc] sm:$0xf]
    %v189 = vld [vmem:[%s3] sm:$0x1]
    %v191 = vlaneseq
    %v192 = vshrl.u32 %v191, 7
    %v193 = vsub.s32 0, %v192
    %v194 = vrot.slane %v189, %v193
    %v200 = vunpack.c.l.b16 %v185
    %v201 = vunpack.c.l.b16 %v186
    %v202 = vunpack.c.l.b16 %v187
    %v203 = vunpack.c.l.b16 %v188
    %v204 = vpack.c.b16 %v201, %v200
    %v205 = vpack.c.b16 %v203, %v202
    %v209 = vsel %vm71, %v183, 0
    %v212 = vsel %vm71, %v184, 0
    %214 = vmatprep.subr.bf16.mxu0 0
    %215 = vmatpush1.bf16.msra.mxu0 %v204
    %216 = vmatprep.subr.bf16.mxu0 0
    %217 = vmatpush1.bf16.msra.mxu0 %v205
    %218 = vmatprep.subr.bf16.mxu0 0
    %219 = vmatpush1.bf16.msra.mxu0 0
    %220 = vmatprep.subr.bf16.mxu0 0
    %221 = vmatpush1.bf16.msra.mxu0 0
    %222 = vmatprep.subr.bf16.mxu0 0
    %223 = vmatpush1.bf16.msra.mxu0 0
    %224 = vmatprep.subr.bf16.mxu0 0
    %225 = vmatpush1.bf16.msra.mxu0 0
    %226 = vmatprep.subr.bf16.mxu0 0
    %227 = vmatpush1.bf16.msra.mxu0 0
    %228 = vmatprep.subr.bf16.mxu0 0
    %229 = vmatpush1.bf16.msra.mxu0 0
    %230 = vmatprep.subr.bf16.mxu0 0
    %231 = vmatpush1.bf16.msra.mxu0 0
    %232 = vmatprep.subr.bf16.mxu0 0
    %233 = vmatpush1.bf16.msra.mxu0 0
    %234 = vmatprep.subr.bf16.mxu0 0
    %235 = vmatpush1.bf16.msra.mxu0 0
    %236 = vmatprep.subr.bf16.mxu0 0
    %237 = vmatpush1.bf16.msra.mxu0 0
    %238 = vmatprep.subr.bf16.mxu0 0
    %239 = vmatpush1.bf16.msra.mxu0 0
    %240 = vmatprep.subr.bf16.mxu0 0
    %241 = vmatpush1.bf16.msra.mxu0 0
    %242 = vmatprep.subr.bf16.mxu0 0
    %243 = vmatpush1.bf16.msra.mxu0 0
    %244 = vmatprep.subr.bf16.mxu0 0
    %245 = vmatpush1.bf16.msra.mxu0 0
    %246 = vmatprep.mubr.bf16.mxu0 0
    %247 = vmatmul.mubr.bf16.gmra.mrb[0].mxu0 %v209
    %v248 = vpop.f32.mrb[0].mxu0
    %v249 = vadd.f32 %v194, %v248
    %v250 = vpop.f32.mrb[0].mxu0
    %v251 = vpop.f32.mrb[0].mxu0
    %v252 = vadd.f32 %v194, %v251
    %v253 = vpop.f32.mrb[0].mxu0
    %254 = vmatprep.mubr.bf16.mxu0 0
    %255 = vmatmul.mubr.bf16.gmra.mrb[0].mxu0 %v212
    %v256 = vpop.f32.mrb[0].mxu0
    %v257 = vadd.f32 %v194, %v256
    %v258 = vpop.f32.mrb[0].mxu0
    %v259 = vpop.f32.mrb[0].mxu0
    %v260 = vadd.f32 %v194, %v259
    %v261 = vpop.f32.mrb[0].mxu0
    %262 = vdwg.mxu0
    %v263 = vmax.f32 %v249, 0.0
    %v264 = vmax.f32 %v252, 0.0
    %v265 = vmax.f32 %v257, 0.0
    %v266 = vmax.f32 %v260, 0.0
    %v267 = vpack.c.bf16 %v264, %v263
    %v268 = vpack.c.bf16 %v266, %v265
    %v269 = vld [vmem:[%s4] sm:$0xf]
    %v270 = vld [vmem:[%s4 + $0x4] sm:$0xf]
    %v271 = vld [vmem:[%s4 + $0x8] sm:$0xf]
    %v272 = vld [vmem:[%s4 + $0xc] sm:$0xf]
    %v273 = vld [vmem:[%s5] sm:$0x1]
    %v275 = vlaneseq
    %v276 = vshrl.u32 %v275, 7
    %v277 = vsub.s32 0, %v276
    %v278 = vrot.slane %v273, %v277
    %v284 = vunpack.c.l.b16 %v269
    %v285 = vunpack.c.l.b16 %v270
    %v286 = vunpack.c.l.b16 %v271
    %v287 = vunpack.c.l.b16 %v272
    %v288 = vpack.c.b16 %v285, %v284
    %v289 = vpack.c.b16 %v287, %v286
    %v293 = vsel %vm71, %v267, 0
    %v296 = vsel %vm71, %v268, 0
    %298 = vmatprep.subr.bf16.mxu0 0
    %299 = vmatpush1.bf16.msra.mxu0 %v288
    %300 = vmatprep.subr.bf16.mxu0 0
    %301 = vmatpush1.bf16.msra.mxu0 %v289
    %302 = vmatprep.subr.bf16.mxu0 0
    %303 = vmatpush1.bf16.msra.mxu0 0
    %304 = vmatprep.subr.bf16.mxu0 0
    %305 = vmatpush1.bf16.msra.mxu0 0
    %306 = vmatprep.subr.bf16.mxu0 0
    %307 = vmatpush1.bf16.msra.mxu0 0
    %308 = vmatprep.subr.bf16.mxu0 0
    %309 = vmatpush1.bf16.msra.mxu0 0
    %310 = vmatprep.subr.bf16.mxu0 0
    %311 = vmatpush1.bf16.msra.mxu0 0
    %312 = vmatprep.subr.bf16.mxu0 0
    %313 = vmatpush1.bf16.msra.mxu0 0
    %314 = vmatprep.subr.bf16.mxu0 0
    %315 = vmatpush1.bf16.msra.mxu0 0
    %316 = vmatprep.subr.bf16.mxu0 0
    %317 = vmatpush1.bf16.msra.mxu0 0
    %318 = vmatprep.subr.bf16.mxu0 0
    %319 = vmatpush1.bf16.msra.mxu0 0
    %320 = vmatprep.subr.bf16.mxu0 0
    %321 = vmatpush1.bf16.msra.mxu0 0
    %322 = vmatprep.subr.bf16.mxu0 0
    %323 = vmatpush1.bf16.msra.mxu0 0
    %324 = vmatprep.subr.bf16.mxu0 0
    %325 = vmatpush1.bf16.msra.mxu0 0
    %326 = vmatprep.subr.bf16.mxu0 0
    %327 = vmatpush1.bf16.msra.mxu0 0
    %328 = vmatprep.subr.bf16.mxu0 0
    %329 = vmatpush1.bf16.msra.mxu0 0
    %330 = vmatprep.mubr.bf16.mxu0 0
    %331 = vmatmul.mubr.bf16.gmra.mrb[0].mxu0 %v293
    %v332 = vpop.f32.mrb[0].mxu0
    %v333 = vadd.f32 %v278, %v332
    %v334 = vpop.f32.mrb[0].mxu0
    %v335 = vpop.f32.mrb[0].mxu0
    %v336 = vadd.f32 %v278, %v335
    %v337 = vpop.f32.mrb[0].mxu0
    %338 = vmatprep.mubr.bf16.mxu0 0
    %339 = vmatmul.mubr.bf16.gmra.mrb[0].mxu0 %v296
    %v340 = vpop.f32.mrb[0].mxu0
    %v341 = vadd.f32 %v278, %v340
    %v342 = vpop.f32.mrb[0].mxu0
    %v343 = vpop.f32.mrb[0].mxu0
    %v344 = vadd.f32 %v278, %v343
    %v345 = vpop.f32.mrb[0].mxu0
    %346 = vdwg.mxu0
    %v347 = vxor.u32 %v333, 2147483648
    %v348 = vxor.u32 %v336, 2147483648
    %v349 = vxor.u32 %v341, 2147483648
    %v350 = vxor.u32 %v344, 2147483648
    %v351 = vmul.f32 %v347, 1.442695
    %v352 = vpow.pop %v351
    %v353 = vmul.f32 %v348, 1.442695
    %v354 = vpow.pop %v353
    %v355 = vmul.f32 %v349, 1.442695
    %v356 = vpow.pop %v355
    %v357 = vmul.f32 %v350, 1.442695
    %v358 = vpow.pop %v357
    %v359 = vadd.f32 %v352, 1.0
    %v360 = vadd.f32 %v354, 1.0
    %v361 = vadd.f32 %v356, 1.0
    %v362 = vadd.f32 %v358, 1.0
    %v363 = vrcp.pop %v359
    %v364 = vmul.f32 1.0, %v363
    %v365 = vrcp.pop %v360
    %v366 = vmul.f32 1.0, %v365
    %v367 = vrcp.pop %v361
    %v368 = vmul.f32 1.0, %v367
    %v369 = vrcp.pop %v362
    %v370 = vmul.f32 1.0, %v369
    %v371 = vmul.f32 %v364, %v113
    %v372 = vmul.f32 %v366, %v116
    %v373 = vmul.f32 %v368, %v121
    %v374 = vmul.f32 %v370, %v124
    %v375 = vpack.c.bf16 %v372, %v371
    %v376 = vpack.c.bf16 %v374, %v373
    %v377 = vld [vmem:[%s6] sm:$0xf]
    %v378 = vld [vmem:[%s6 + $0x4] sm:$0xf]
    %v379 = vld [vmem:[%s6 + $0x8] sm:$0xf]
    %v380 = vld [vmem:[%s6 + $0xc] sm:$0xf]
    %v381 = vld [vmem:[%s6 + $0x10] sm:$0xf]
    %v382 = vld [vmem:[%s6 + $0x14] sm:$0xf]
    %v383 = vld [vmem:[%s6 + $0x18] sm:$0xf]
    %v384 = vld [vmem:[%s6 + $0x1c] sm:$0xf]
    %v385 = vld [vmem:[%s6 + $0x20] sm:$0xf]
    %v386 = vld [vmem:[%s6 + $0x24] sm:$0xf]
    %v387 = vld [vmem:[%s6 + $0x28] sm:$0xf]
    %v388 = vld [vmem:[%s6 + $0x2c] sm:$0xf]
    %v389 = vld [vmem:[%s6 + $0x30] sm:$0xf]
    %v390 = vld [vmem:[%s6 + $0x34] sm:$0xf]
    %v391 = vld [vmem:[%s6 + $0x38] sm:$0xf]
    %v392 = vld [vmem:[%s6 + $0x3c] sm:$0xf]
    %v393 = vld [vmem:[%s6 + $0x40] sm:$0xf]
    %v394 = vld [vmem:[%s6 + $0x44] sm:$0xf]
    %v395 = vld [vmem:[%s6 + $0x48] sm:$0xf]
    %v396 = vld [vmem:[%s6 + $0x4c] sm:$0xf]
    %v397 = vld [vmem:[%s6 + $0x50] sm:$0xf]
    %v398 = vld [vmem:[%s6 + $0x54] sm:$0xf]
    %v399 = vld [vmem:[%s6 + $0x58] sm:$0xf]
    %v400 = vld [vmem:[%s6 + $0x5c] sm:$0xf]
    %v401 = vld [vmem:[%s6 + $0x60] sm:$0xf]
    %v402 = vld [vmem:[%s6 + $0x64] sm:$0xf]
    %v403 = vld [vmem:[%s6 + $0x68] sm:$0xf]
    %v404 = vld [vmem:[%s6 + $0x6c] sm:$0xf]
    %v405 = vld [vmem:[%s6 + $0x70] sm:$0xf]
    %v406 = vld [vmem:[%s6 + $0x74] sm:$0xf]
    %v407 = vld [vmem:[%s6 + $0x78] sm:$0xf]
    %v408 = vld [vmem:[%s6 + $0x7c] sm:$0xf]
    %v441 = vunpack.c.l.b16 %v377
    %v442 = vunpack.c.l.b16 %v378
    %v443 = vunpack.c.l.b16 %v379
    %v444 = vunpack.c.l.b16 %v380
    %v445 = vunpack.c.l.b16 %v381
    %v446 = vunpack.c.l.b16 %v382
    %v447 = vunpack.c.l.b16 %v383
    %v448 = vunpack.c.l.b16 %v384
    %v449 = vunpack.c.l.b16 %v385
    %v450 = vunpack.c.l.b16 %v386
    %v451 = vunpack.c.l.b16 %v387
    %v452 = vunpack.c.l.b16 %v388
    %v453 = vunpack.c.l.b16 %v389
    %v454 = vunpack.c.l.b16 %v390
    %v455 = vunpack.c.l.b16 %v391
    %v456 = vunpack.c.l.b16 %v392
    %v457 = vunpack.c.l.b16 %v393
    %v458 = vunpack.c.l.b16 %v394
    %v459 = vunpack.c.l.b16 %v395
    %v460 = vunpack.c.l.b16 %v396
    %v461 = vunpack.c.l.b16 %v397
    %v462 = vunpack.c.l.b16 %v398
    %v463 = vunpack.c.l.b16 %v399
    %v464 = vunpack.c.l.b16 %v400
    %v465 = vunpack.c.l.b16 %v401
    %v466 = vunpack.c.l.b16 %v402
    %v467 = vunpack.c.l.b16 %v403
    %v468 = vunpack.c.l.b16 %v404
    %v469 = vunpack.c.l.b16 %v405
    %v470 = vunpack.c.l.b16 %v406
    %v471 = vunpack.c.l.b16 %v407
    %v472 = vunpack.c.l.b16 %v408
    %v473 = vpack.c.b16 %v442, %v441
    %v474 = vpack.c.b16 %v444, %v443
    %v475 = vpack.c.b16 %v446, %v445
    %v476 = vpack.c.b16 %v448, %v447
    %v477 = vpack.c.b16 %v450, %v449
    %v478 = vpack.c.b16 %v452, %v451
    %v479 = vpack.c.b16 %v454, %v453
    %v480 = vpack.c.b16 %v456, %v455
    %v481 = vpack.c.b16 %v458, %v457
    %v482 = vpack.c.b16 %v460, %v459
    %v483 = vpack.c.b16 %v462, %v461
    %v484 = vpack.c.b16 %v464, %v463
    %v485 = vpack.c.b16 %v466, %v465
    %v486 = vpack.c.b16 %v468, %v467
    %v487 = vpack.c.b16 %v470, %v469
    %v488 = vpack.c.b16 %v472, %v471
    %505 = vmatprep.subr.bf16.mxu0 0
    %506 = vmatpush1.bf16.msra.mxu0 %v473
    %507 = vmatprep.subr.bf16.mxu0 0
    %508 = vmatpush1.bf16.msra.mxu0 %v474
    %509 = vmatprep.subr.bf16.mxu0 0
    %510 = vmatpush1.bf16.msra.mxu0 %v475
    %511 = vmatprep.subr.bf16.mxu0 0
    %512 = vmatpush1.bf16.msra.mxu0 %v476
    %513 = vmatprep.subr.bf16.mxu0 0
    %514 = vmatpush1.bf16.msra.mxu0 %v477
    %515 = vmatprep.subr.bf16.mxu0 0
    %516 = vmatpush1.bf16.msra.mxu0 %v478
    %517 = vmatprep.subr.bf16.mxu0 0
    %518 = vmatpush1.bf16.msra.mxu0 %v479
    %519 = vmatprep.subr.bf16.mxu0 0
    %520 = vmatpush1.bf16.msra.mxu0 %v480
    %521 = vmatprep.subr.bf16.mxu0 0
    %522 = vmatpush1.bf16.msra.mxu0 %v481
    %523 = vmatprep.subr.bf16.mxu0 0
    %524 = vmatpush1.bf16.msra.mxu0 %v482
    %525 = vmatprep.subr.bf16.mxu0 0
    %526 = vmatpush1.bf16.msra.mxu0 %v483
    %527 = vmatprep.subr.bf16.mxu0 0
    %528 = vmatpush1.bf16.msra.mxu0 %v484
    %529 = vmatprep.subr.bf16.mxu0 0
    %530 = vmatpush1.bf16.msra.mxu0 %v485
    %531 = vmatprep.subr.bf16.mxu0 0
    %532 = vmatpush1.bf16.msra.mxu0 %v486
    %533 = vmatprep.subr.bf16.mxu0 0
    %534 = vmatpush1.bf16.msra.mxu0 %v487
    %535 = vmatprep.subr.bf16.mxu0 0
    %536 = vmatpush1.bf16.msra.mxu0 %v488
    %537 = vmatprep.mubr.bf16.mxu0 %v376
    %538 = vmatmul.mubr.bf16.gmra.mrb[0].mxu0 %v375
    %v539 = vpop.f32.mrb[0].mxu0
    %v540 = vadd.f32 0.0, %v539
    %v541 = vpop.f32.mrb[0].mxu0
    %v542 = vpop.f32.mrb[0].mxu0
    %v543 = vadd.f32 0.0, %v542
    %v544 = vpop.f32.mrb[0].mxu0
    %545 = vdwg.mxu0
    %546 = vst [vmem:[%s7] sm:$0xff] %v540
    %547 = vst [vmem:[%s7 + $0x8] sm:$0xff] %v543
    // Predicated region
    $region34: #{_lambda_.1} parent=1 // pred_check
      _
    $region35: #{_lambda_.1} parent=1 // pred_check_branch
      %549 = sbr.rel (0) target = $region37
    $region36: #{_lambda_.1} parent=1 // pred_region
      _
    $region37: #{_lambda_.1} parent=1 // pred_fallthru
      _
    // Predicated region
    $region38: #{_lambda_.1} parent=1 // pred_check
      _
    $region39: #{_lambda_.1} parent=1 // pred_check_branch
      %551 = sbr.rel (0) target = $region41
    $region40: #{_lambda_.1} parent=1 // pred_region
      _
    $region41: #{_lambda_.1} parent=1 // pred_fallthru
      _
    %552 = vsyncpa [#allocation3], 1

</llo_original>
